<compile_context>
chip_gen: v7x
topology: tpu7x:2x2x1
jax: 0.10.0
libtpu: 0.0.40
codegen_flags: <defaults>
</compile_context>

<pallas_src>
import jax
import jax.numpy as jnp
from jax import lax
from jax.experimental import pallas as pl
from jax.experimental.pallas import tpu as pltpu

ACT_DTYPE = jnp.bfloat16          # activations & conv weights on the MXU
_TARGET_STEP_BYTES = 2 * 1024 * 1024


# -----------------------------------------------------------------------------
# Generation-aware tiling / VMEM budgeting
# -----------------------------------------------------------------------------
def _vmem_capacity_bytes():
    try:
        info = pltpu.get_tpu_info()
        cap = getattr(info, "vmem_capacity_bytes", None)
        if cap:
            return int(cap)
    except Exception:
        pass
    return 64 * 1024 * 1024       # conservative default (v7x per-TC VMEM)


def _select_batch_tile(n, per_img_io_bytes, live_bytes):
    """Images per grid step: big enough to amortize ~0.35us/step overhead,
    small enough that double-buffered I/O blocks fit the per-gen VMEM."""
    budget = max(int(_vmem_capacity_bytes() * 0.5) - live_bytes - (4 << 20),
                 2 * per_img_io_bytes)
    bt_cap = max(1, budget // (2 * per_img_io_bytes))
    bt_tgt = max(1, -(-_TARGET_STEP_BYTES // per_img_io_bytes))
    bt = int(min(n, bt_cap, bt_tgt))
    while n % bt:
        bt -= 1
    if n >= 2 and n // bt < 2:
        # keep >= 2 parallel grid steps so both v7x TensorCores are used.
        for d in range(bt - 1, 0, -1):
            if n % d == 0 and n // d >= 2:
                bt = d
                break
    return bt


def _vmem_limit_bytes(block_io_bytes, live_bytes):
    cap = _vmem_capacity_bytes()
    want = 2 * block_io_bytes + live_bytes + (16 << 20)
    return int(min(max(want, 32 << 20), int(cap * 0.9)))


def _rep_spec(shape):
    return pl.BlockSpec(shape, lambda n: (0,) * len(shape))


# -----------------------------------------------------------------------------
# Precomputed depthwise edge masks (built with plain jnp in the wrapper)
# -----------------------------------------------------------------------------
def _dw_masks_s1(h, w):
    s = jnp.arange(h * w)
    col, row = s % w, s // w
    rows = []
    for dh in (-1, 0, 1):
        for dw in (-1, 0, 1):
            ok = ((col + dw >= 0) & (col + dw < w)
                  & (row + dh >= 0) & (row + dh < h))
            rows.append(ok)
    return jnp.stack(rows).astype(jnp.float32)            # (9, h*w)


def _dw_masks_s2(hh, wh):
    s = jnp.arange(hh * wh)
    xo, yo = s % wh, s // wh
    rows = []
    for dh in (-1, 0, 1):
        for dw in (-1, 0, 1):
            dy = -1 if dh == -1 else 0
            dx = -1 if dw == -1 else 0
            rows.append((xo + dx >= 0) & (yo + dy >= 0))
    return jnp.stack(rows).astype(jnp.float32)             # (9, hh*wh)


def _s2_tap_table(wh, so):
    """For each 3x3 tap: which 2x2 phase plane and which lane shift."""
    taps = []
    for dh in (-1, 0, 1):
        for dw in (-1, 0, 1):
            a, dy = (1, -1) if dh == -1 else ((0, 0) if dh == 0 else (1, 0))
            b, dx = (1, -1) if dw == -1 else ((0, 0) if dw == 0 else (1, 0))
            taps.append((2 * a + b, (-(dy * wh + dx)) % so))
    return taps


# -----------------------------------------------------------------------------
# Fused stride == 1 kernel: x1 passthrough + branch2 + channel_shuffle
# -----------------------------------------------------------------------------
def _make_stride1_kernel(bt, h, w, cb):
    s = h * w
    shifts = [(-(dh * w + dw)) % s for dh in (-1, 0, 1) for dw in (-1, 0, 1)]

    def kernel(x_ref, w1t_ref, s1_ref, b1_ref, wdw_ref, msk_ref,
               s2_ref, b2_ref, w2s_ref, sev_ref, s3_ref, b3_ref, o_ref):
        w1t = w1t_ref[...]
        wdw = wdw_ref[...]                                  # (cb, 9) f32
        msk = msk_ref[...]                                  # (9, s)  f32
        w2s = w2s_ref[...]
        sev = sev_ref[...]
        s1, b1 = s1_ref[...], b1_ref[...]
        s2, b2 = s2_ref[...], b2_ref[...]
        s3, b3 = s3_ref[...], b3_ref[...]

        def body(b, carry):
            x = x_ref[b]                                    # (2*cb, s) bf16
            x2 = x[cb:, :]
            # branch2: 1x1 conv -> BN -> ReLU (MXU, f32 accumulation)
            hh = jnp.dot(w1t, x2, preferred_element_type=jnp.float32)
            hh = jnp.maximum(hh * s1 + b1, 0.0)
            hf = hh.astype(ACT_DTYPE).astype(jnp.float32)   # bf16-rounded taps
            # depthwise 3x3 / pad 1 / stride 1: lane rolls + edge masks
            acc = jnp.zeros((cb, s), jnp.float32)
            for k, sh in enumerate(shifts):
                t = hf if sh == 0 else pltpu.roll(hf, sh, axis=1)
                acc = acc + (t * msk[k:k + 1, :]) * wdw[:, k:k + 1]
            h2b = (acc * s2 + b2).astype(ACT_DTYPE)
            # second 1x1 conv; channel_shuffle folded into odd output rows
            z = jnp.dot(w2s, h2b, preferred_element_type=jnp.float32)
            r2 = jnp.maximum(z * s3 + b3, 0.0)              # even rows stay 0
            # x1 passthrough scattered onto even output rows (0/1 matmul)
            ev = jnp.dot(sev, x[:cb, :], preferred_element_type=jnp.float32)
            o_ref[b] = (ev + r2).astype(o_ref.dtype)
            return carry

        lax.fori_loop(0, bt, body, 0)

    return kernel


# -----------------------------------------------------------------------------
# Fused stride == 2 kernel: branch1 + branch2 + channel_shuffle on phase planes
# -----------------------------------------------------------------------------
def _make_stride2_kernel(bt, hh, wh, cin, cb):
    so = hh * wh
    taps = _s2_tap_table(wh, so)

    def kernel(xp_ref, w1t_ref, s1_ref, b1_ref, wdw2_ref, s2_ref, b2_ref,
               w2s_ref, wdw1_ref, sa_ref, ba_ref, w1bs_ref,
               sc_ref, bc_ref, msk_ref, o_ref):
        w1t = w1t_ref[...]
        wdw2 = wdw2_ref[...]
        wdw1 = wdw1_ref[...]
        w2s = w2s_ref[...]
        w1bs = w1bs_ref[...]
        msk = msk_ref[...]
        s1, b1 = s1_ref[...], b1_ref[...]
        s2, b2 = s2_ref[...], b2_ref[...]
        sa, ba = sa_ref[...], ba_ref[...]
        sc, bc = sc_ref[...], bc_ref[...]

        def dw_s2(planes_f32, wdw, c):
            acc = jnp.zeros((c, so), jnp.float32)
            for k, (p, sh) in enumerate(taps):
                t = planes_f32[p] if sh == 0 else pltpu.roll(planes_f32[p], sh, axis=1)
                acc = acc + (t * msk[k:k + 1, :]) * wdw[:, k:k + 1]
            return acc

        def body(b, carry):
            xa = xp_ref[b]                                   # (4, cin, so) bf16
            xph = [xa[p].astype(jnp.float32) for p in range(4)]
            # branch2: 1x1 -> BN/ReLU (per phase) -> dw3x3 s2 -> BN -> 1x1
            hph = []
            for p in range(4):
                hp = jnp.dot(w1t, xa[p], preferred_element_type=jnp.float32)
                hp = jnp.maximum(hp * s1 + b1, 0.0)
                hph.append(hp.astype(ACT_DTYPE).astype(jnp.float32))
            h2b = (dw_s2(hph, wdw2, cb) * s2 + b2).astype(ACT_DTYPE)
            # branch1: dw3x3 s2 -> BN -> 1x1
            h1b = (dw_s2(xph, wdw1, cin) * sa + ba).astype(ACT_DTYPE)
            # both 1x1 convs share one output slab; channel_shuffle folded into
            # row-scattered weights (branch1 -> even rows, branch2 -> odd rows)
            z = (jnp.dot(w2s, h2b, preferred_element_type=jnp.float32)
                 + jnp.dot(w1bs, h1b, preferred_element_type=jnp.float32))
            o_ref[b] = jnp.maximum(z * sc + bc, 0.0).astype(o_ref.dtype)
            return carry

        lax.fori_loop(0, bt, body, 0)

    return kernel


# -----------------------------------------------------------------------------
# pallas_call wrappers (weight folding + tiling happens here, once)
# -----------------------------------------------------------------------------
def _stride1_block(x_nchw, p2):
    n, cin, h, w = x_nchw.shape
    cb = cin // 2
    s = h * w

    per_img_io = (cin + 2 * cb) * s * 2                     # bf16 in + out
    live = (2 * cin + 48 * cb) * s * 4 + (1 << 20)
    bt = _select_batch_tile(n, per_img_io, live)

    x3 = x_nchw.astype(ACT_DTYPE).reshape(n, cin, s)        # free view of NCHW

    eye = jnp.eye(cb, dtype=jnp.float32)
    w1t = p2["w1"].astype(jnp.float32).T.astype(ACT_DTYPE)              # (cb, cb)
    wdw9 = p2["wdw"].astype(jnp.float32).reshape(9, cb).T               # (cb, 9)
    w2t = p2["w2"].astype(jnp.float32).T
    w2s = jnp.zeros((2 * cb, cb), jnp.float32).at[1::2].set(w2t).astype(ACT_DTYPE)
    sev = jnp.zeros((2 * cb, cb), jnp.float32).at[0::2].set(eye).astype(ACT_DTYPE)
    s3 = jnp.ones((2 * cb, 1), jnp.float32).at[1::2].set(p2["s3"].reshape(cb, 1))
    b3 = jnp.zeros((2 * cb, 1), jnp.float32).at[1::2].set(p2["b3"].reshape(cb, 1))
    s1, b1 = p2["s1"].reshape(cb, 1), p2["b1"].reshape(cb, 1)
    s2, b2 = p2["s2"].reshape(cb, 1), p2["b2"].reshape(cb, 1)
    msk = _dw_masks_s1(h, w)

    kernel = _make_stride1_kernel(bt, h, w, cb)
    out = pl.pallas_call(
        kernel,
        out_shape=jax.ShapeDtypeStruct((n, 2 * cb, s), ACT_DTYPE),
        grid=(n // bt,),
        in_specs=[
            pl.BlockSpec((bt, cin, s), lambda i: (i, 0, 0)),
            _rep_spec((cb, cb)), _rep_spec((cb, 1)), _rep_spec((cb, 1)),
            _rep_spec((cb, 9)), _rep_spec((9, s)),
            _rep_spec((cb, 1)), _rep_spec((cb, 1)),
            _rep_spec((2 * cb, cb)), _rep_spec((2 * cb, cb)),
            _rep_spec((2 * cb, 1)), _rep_spec((2 * cb, 1)),
        ],
        out_specs=pl.BlockSpec((bt, 2 * cb, s), lambda i: (i, 0, 0)),
        compiler_params=pltpu.CompilerParams(
            dimension_semantics=("parallel",),
            vmem_limit_bytes=_vmem_limit_bytes(bt * per_img_io, live)),
    )(x3, w1t, s1, b1, wdw9, msk, s2, b2, w2s, sev, s3, b3)
    return out.reshape(n, 2 * cb, h, w)


def _stride2_block(x_nchw, p1, p2):
    n, cin, h, w = x_nchw.shape
    assert h % 2 == 0 and w % 2 == 0   # TODO(synk): odd spatial extents
    hh, wh = h // 2, w // 2
    so = hh * wh
    cb = p2["w1"].shape[1]

    # 2x2 space-to-phase reorder (one wrapper-side XLA pass over the input);
    # every stride-2 depthwise tap then becomes a unit lane shift in-kernel.
    # TODO(synk): fold this de-interleave into the kernel to drop the extra
    # HBM round trip.
    xp = x_nchw.astype(ACT_DTYPE).reshape(n, cin, hh, 2, wh, 2)
    xp = xp.transpose(0, 3, 5, 1, 2, 4).reshape(n, 4, cin, so)

    per_img_io = (4 * cin * so + 2 * cb * so) * 2
    live = (8 * cin + 48 * cb) * so * 4 + (1 << 20)
    bt = _select_batch_tile(n, per_img_io, live)

    w1t = p2["w1"].astype(jnp.float32).T.astype(ACT_DTYPE)              # (cb, cin)
    wdw2 = p2["wdw"].astype(jnp.float32).reshape(9, cb).T               # (cb, 9)
    wdw1 = p1["wdw"].astype(jnp.float32).reshape(9, cin).T              # (cin, 9)
    w2t = p2["w2"].astype(jnp.float32).T
    w1bt = p1["w"].astype(jnp.float32).T
    w2s = jnp.zeros((2 * cb, cb), jnp.float32).at[1::2].set(w2t).astype(ACT_DTYPE)
    w1bs = jnp.zeros((2 * cb, cin), jnp.float32).at[0::2].set(w1bt).astype(ACT_DTYPE)
    sc = (jnp.zeros((2 * cb, 1), jnp.float32)
          .at[0::2].set(p1["sb"].reshape(cb, 1))
          .at[1::2].set(p2["s3"].reshape(cb, 1)))
    bc = (jnp.zeros((2 * cb, 1), jnp.float32)
          .at[0::2].set(p1["bb"].reshape(cb, 1))
          .at[1::2].set(p2["b3"].reshape(cb, 1)))
    s1, b1 = p2["s1"].reshape(cb, 1), p2["b1"].reshape(cb, 1)
    s2, b2 = p2["s2"].reshape(cb, 1), p2["b2"].reshape(cb, 1)
    sa, ba = p1["sa"].reshape(cin, 1), p1["ba"].reshape(cin, 1)
    msk = _dw_masks_s2(hh, wh)

    kernel = _make_stride2_kernel(bt, hh, wh, cin, cb)
    out = pl.pallas_call(
        kernel,
        out_shape=jax.ShapeDtypeStruct((n, 2 * cb, so), ACT_DTYPE),
        grid=(n // bt,),
        in_specs=[
            pl.BlockSpec((bt, 4, cin, so), lambda i: (i, 0, 0, 0)),
            _rep_spec((cb, cin)), _rep_spec((cb, 1)), _rep_spec((cb, 1)),
            _rep_spec((cb, 9)), _rep_spec((cb, 1)), _rep_spec((cb, 1)),
            _rep_spec((2 * cb, cb)),
            _rep_spec((cin, 9)), _rep_spec((cin, 1)), _rep_spec((cin, 1)),
            _rep_spec((2 * cb, cin)),
            _rep_spec((2 * cb, 1)), _rep_spec((2 * cb, 1)),
            _rep_spec((9, so)),
        ],
        out_specs=pl.BlockSpec((bt, 2 * cb, so), lambda i: (i, 0, 0)),
        compiler_params=pltpu.CompilerParams(
            dimension_semantics=("parallel",),
            vmem_limit_bytes=_vmem_limit_bytes(bt * per_img_io, live)),
    )(xp, w1t, s1, b1, wdw2, s2, b2, w2s, wdw1, sa, ba, w1bs, sc, bc, msk)
    return out.reshape(n, 2 * cb, hh, wh)


def inverted_residual_forward(x_nchw, params, stride):
    """NCHW in / NCHW out, matching the PyTorch InvertedResidual.forward."""
    if stride == 1:
        return _stride1_block(x_nchw, params["branch2"])
    return _stride2_block(x_nchw, params["branch1"], params["branch2"])


# -----------------------------------------------------------------------------
# Pure-JAX reference mirroring the PyTorch module (and the bf16 cast points)
# -----------------------------------------------------------------------------
def _dwconv_ref(x, wdw, stride):
    c = x.shape[-1]
    return lax.conv_general_dilated(
        x, wdw[:, :, None, :], window_strides=(stride, stride),
        padding=((1, 1), (1, 1)),
        dimension_numbers=("NHWC", "HWIO", "NHWC"),
        feature_group_count=c,
        preferred_element_type=jnp.float32)


def _ref_branch2(x, p, stride):
    h = jnp.einsum("nhwc,cd->nhwd", x, p["w1"],
                   preferred_element_type=jnp.float32)
    h = jax.nn.relu(h * p["s1"] + p["b1"]).astype(ACT_DTYPE)
    h = _dwconv_ref(h, p["wdw"], stride) * p["s2"] + p["b2"]
    h = jnp.einsum("nhwc,cd->nhwd", h.astype(ACT_DTYPE), p["w2"],
                   preferred_element_type=jnp.float32)
    return jax.nn.relu(h * p["s3"] + p["b3"])


def _ref_branch1(x, p, stride):
    h = _dwconv_ref(x, p["wdw"], stride) * p["sa"] + p["ba"]
    h = jnp.einsum("nhwc,cd->nhwd", h.astype(ACT_DTYPE), p["w"],
                   preferred_element_type=jnp.float32)
    return jax.nn.relu(h * p["sb"] + p["bb"])


def _channel_shuffle_ref(x_nchw, groups):
    n, c, h, w = x_nchw.shape
    x = x_nchw.reshape(n, groups, c // groups, h, w)
    x = jnp.transpose(x, (0, 2, 1, 3, 4))
    return x.reshape(n, c, h, w)


def ref_forward(x_nchw, params, stride):
    x = jnp.transpose(x_nchw, (0, 2, 3, 1)).astype(ACT_DTYPE)
    if stride == 1:
        c = x.shape[-1]
        x1, x2 = x[..., :c // 2], x[..., c // 2:]
        out = jnp.concatenate(
            [x1.astype(jnp.float32), _ref_branch2(x2, params["branch2"], 1)],
            axis=-1)
    else:
        out = jnp.concatenate(
            [_ref_branch1(x, params["branch1"], stride),
             _ref_branch2(x, params["branch2"], stride)], axis=-1)
    out = jnp.transpose(out.astype(ACT_DTYPE), (0, 3, 1, 2))
    return _channel_shuffle_ref(out, 2)


# -----------------------------------------------------------------------------
# Deterministic parameter init (BN folded to per-channel scale/bias, eval mode)
# -----------------------------------------------------------------------------
def _fold_bn(key, c, eps=1e-5):
    k1, k2, k3, k4 = jax.random.split(key, 4)
    gamma = jax.random.uniform(k1, (c,), jnp.float32, 0.5, 1.5)
    beta = 0.1 * jax.random.normal(k2, (c,), jnp.float32)
    mean = 0.1 * jax.random.normal(k3, (c,), jnp.float32)
    var = jax.random.uniform(k4, (c,), jnp.float32, 0.5, 1.5)
    scale = gamma / jnp.sqrt(var + eps)
    bias = beta - mean * scale
    return scale.reshape(1, c), bias.reshape(1, c)


def init_params(key, inp, oup, stride):
    bf = oup // 2
    assert stride != 1 or inp == bf * 2
    ks = jax.random.split(key, 10)
    cin2 = inp if stride > 1 else bf
    p2 = {
        "w1": (0.2 * jax.random.normal(ks[0], (cin2, bf))).astype(ACT_DTYPE),
        "wdw": (0.2 * jax.random.normal(ks[1], (3, 3, bf))).astype(ACT_DTYPE),
        "w2": (0.2 * jax.random.normal(ks[2], (bf, bf))).astype(ACT_DTYPE),
    }
    p2["s1"], p2["b1"] = _fold_bn(ks[3], bf)
    p2["s2"], p2["b2"] = _fold_bn(ks[4], bf)
    p2["s3"], p2["b3"] = _fold_bn(ks[5], bf)
    params = {"branch2": p2, "branch1": None}
    if stride > 1:
        p1 = {
            "wdw": (0.2 * jax.random.normal(ks[6], (3, 3, inp))).astype(ACT_DTYPE),
            "w": (0.2 * jax.random.normal(ks[7], (inp, bf))).astype(ACT_DTYPE),
        }
        p1["sa"], p1["ba"] = _fold_bn(ks[8], inp)
        p1["sb"], p1["bb"] = _fold_bn(ks[9], bf)
        params["branch1"] = p1
    return params


# -----------------------------------------------------------------------------
if __name__ == "__main__":
    key = jax.random.PRNGKey(0)
    kx1, kp1, kx2, kp2 = jax.random.split(key, 4)

    # ---- stride == 1 block (inp == oup == 2 * branch_features) --------------
    N, inp, oup, H, W = 2, 16, 16, 8, 8
    x = jax.random.normal(kx1, (N, inp, H, W), jnp.float32)
    params = init_params(kp1, inp, oup, 1)
    out = jax.block_until_ready(inverted_residual_forward(x, params, 1))
    ref = ref_forward(x, params, 1)
    assert out.shape == (N, oup, H, W), out.shape
    assert jnp.allclose(out.astype(jnp.float32), ref.astype(jnp.float32),
                        rtol=2e-2, atol=2e-2), (
        float(jnp.max(jnp.abs(out.astype(jnp.float32)
                              - ref.astype(jnp.float32)))))

    # ---- stride == 2 downsampling block (fused branch1 + branch2) -----------
    N2, inp2, oup2, H2, W2 = 2, 16, 32, 8, 8
    x2 = jax.random.normal(kx2, (N2, inp2, H2, W2), jnp.float32)
    params2 = init_params(kp2, inp2, oup2, 2)
    out2 = jax.block_until_ready(inverted_residual_forward(x2, params2, 2))
    ref2 = ref_forward(x2, params2, 2)
    assert out2.shape == (N2, oup2, H2 // 2, W2 // 2), out2.shape
    assert jnp.allclose(out2.astype(jnp.float32), ref2.astype(jnp.float32),
                        rtol=2e-2, atol=2e-2), (
        float(jnp.max(jnp.abs(out2.astype(jnp.float32)
                              - ref2.astype(jnp.float32)))))

    print("KERNEL_OK")
</pallas_src>

<mosaic_0001>
module attributes {stable_mosaic.version = 11 : i64} {
  func.func @kernel(%arg0: i32, %arg1: memref<1x16x64xbf16, #tpu.memory_space<vmem>>, %arg2: memref<8x8xbf16, #tpu.memory_space<vmem>>, %arg3: memref<8x1xf32, #tpu.memory_space<vmem>>, %arg4: memref<8x1xf32, #tpu.memory_space<vmem>>, %arg5: memref<8x9xf32, #tpu.memory_space<vmem>>, %arg6: memref<9x64xf32, #tpu.memory_space<vmem>>, %arg7: memref<8x1xf32, #tpu.memory_space<vmem>>, %arg8: memref<8x1xf32, #tpu.memory_space<vmem>>, %arg9: memref<16x8xbf16, #tpu.memory_space<vmem>>, %arg10: memref<16x8xbf16, #tpu.memory_space<vmem>>, %arg11: memref<16x1xf32, #tpu.memory_space<vmem>>, %arg12: memref<16x1xf32, #tpu.memory_space<vmem>>, %arg13: memref<1x16x64xbf16, #tpu.memory_space<vmem>>) attributes {dimension_semantics = [#tpu.dimension_semantics<parallel>], iteration_bounds = array<i64: 2>, scalar_prefetch = 0 : i64, scratch_operands = 0 : i64, tpu.core_type = #tpu.core_type<tc>, window_params = [{transform_indices = @transform_0, window_bounds = array<i64: 1, 16, 64>}, {pipeline_mode = #tpu.pipeline_mode<synchronous>, transform_indices = @transform_1, window_bounds = array<i64: 8, 8>}, {pipeline_mode = #tpu.pipeline_mode<synchronous>, transform_indices = @transform_2, window_bounds = array<i64: 8, 1>}, {pipeline_mode = #tpu.pipeline_mode<synchronous>, transform_indices = @transform_3, window_bounds = array<i64: 8, 1>}, {pipeline_mode = #tpu.pipeline_mode<synchronous>, transform_indices = @transform_4, window_bounds = array<i64: 8, 9>}, {pipeline_mode = #tpu.pipeline_mode<synchronous>, transform_indices = @transform_5, window_bounds = array<i64: 9, 64>}, {pipeline_mode = #tpu.pipeline_mode<synchronous>, transform_indices = @transform_6, window_bounds = array<i64: 8, 1>}, {pipeline_mode = #tpu.pipeline_mode<synchronous>, transform_indices = @transform_7, window_bounds = array<i64: 8, 1>}, {pipeline_mode = #tpu.pipeline_mode<synchronous>, transform_indices = @transform_8, window_bounds = array<i64: 16, 8>}, {pipeline_mode = #tpu.pipeline_mode<synchronous>, transform_indices = @transform_9, window_bounds = array<i64: 16, 8>}, {pipeline_mode = #tpu.pipeline_mode<synchronous>, transform_indices = @transform_10, window_bounds = array<i64: 16, 1>}, {pipeline_mode = #tpu.pipeline_mode<synchronous>, transform_indices = @transform_11, window_bounds = array<i64: 16, 1>}, {transform_indices = @transform_12, window_bounds = array<i64: 1, 16, 64>}]} {
    %c0 = arith.constant 0 : index
    %c0_0 = arith.constant 0 : index
    %0 = vector.load %arg2[%c0, %c0_0] : memref<8x8xbf16, #tpu.memory_space<vmem>>, vector<8x8xbf16>
    %c0_1 = arith.constant 0 : index
    %c0_2 = arith.constant 0 : index
    %1 = vector.load %arg5[%c0_1, %c0_2] : memref<8x9xf32, #tpu.memory_space<vmem>>, vector<8x9xf32>
    %c0_3 = arith.constant 0 : index
    %c0_4 = arith.constant 0 : index
    %2 = vector.load %arg6[%c0_3, %c0_4] : memref<9x64xf32, #tpu.memory_space<vmem>>, vector<9x64xf32>
    %c0_5 = arith.constant 0 : index
    %c0_6 = arith.constant 0 : index
    %3 = vector.load %arg9[%c0_5, %c0_6] : memref<16x8xbf16, #tpu.memory_space<vmem>>, vector<16x8xbf16>
    %c0_7 = arith.constant 0 : index
    %c0_8 = arith.constant 0 : index
    %4 = vector.load %arg10[%c0_7, %c0_8] : memref<16x8xbf16, #tpu.memory_space<vmem>>, vector<16x8xbf16>
    %c0_9 = arith.constant 0 : index
    %c0_10 = arith.constant 0 : index
    %5 = vector.load %arg3[%c0_9, %c0_10] : memref<8x1xf32, #tpu.memory_space<vmem>>, vector<8x1xf32>
    %c0_11 = arith.constant 0 : index
    %c0_12 = arith.constant 0 : index
    %6 = vector.load %arg4[%c0_11, %c0_12] : memref<8x1xf32, #tpu.memory_space<vmem>>, vector<8x1xf32>
    %c0_13 = arith.constant 0 : index
    %c0_14 = arith.constant 0 : index
    %7 = vector.load %arg7[%c0_13, %c0_14] : memref<8x1xf32, #tpu.memory_space<vmem>>, vector<8x1xf32>
    %c0_15 = arith.constant 0 : index
    %c0_16 = arith.constant 0 : index
    %8 = vector.load %arg8[%c0_15, %c0_16] : memref<8x1xf32, #tpu.memory_space<vmem>>, vector<8x1xf32>
    %c0_17 = arith.constant 0 : index
    %c0_18 = arith.constant 0 : index
    %9 = vector.load %arg11[%c0_17, %c0_18] : memref<16x1xf32, #tpu.memory_space<vmem>>, vector<16x1xf32>
    %c0_19 = arith.constant 0 : index
    %c0_20 = arith.constant 0 : index
    %10 = vector.load %arg12[%c0_19, %c0_20] : memref<16x1xf32, #tpu.memory_space<vmem>>, vector<16x1xf32>
    %c0_i32 = arith.constant 0 : i32
    %11 = arith.index_cast %c0_i32 : i32 to index
    %c0_21 = arith.constant 0 : index
    %c0_22 = arith.constant 0 : index
    %12 = vector.load %arg1[%11, %c0_21, %c0_22] : memref<1x16x64xbf16, #tpu.memory_space<vmem>>, vector<1x16x64xbf16>
    %13 = vector.shape_cast %12 : vector<1x16x64xbf16> to vector<16x64xbf16>
    %14 = vector.extract_strided_slice %13 {offsets = [8, 0], sizes = [8, 64], strides = [1, 1]} : vector<16x64xbf16> to vector<8x64xbf16>
    %cst = arith.constant dense<0.000000e+00> : vector<8x64xf32>
    %15 = tpu.matmul %0, %14, %cst {dimension_numbers = #tpu.dot_dimension_numbers<[1], [0], [0], [1], [0, 0, 1, 1], [], []>} : vector<8x8xbf16>, vector<8x64xbf16>, vector<8x64xf32> -> vector<8x64xf32>
    %16 = vector.broadcast %5 : vector<8x1xf32> to vector<8x64xf32>
    %17 = arith.mulf %15, %16 : vector<8x64xf32>
    %18 = vector.broadcast %6 : vector<8x1xf32> to vector<8x64xf32>
    %19 = arith.addf %17, %18 : vector<8x64xf32>
    %cst_23 = arith.constant 0.000000e+00 : f32
    %20 = vector.broadcast %cst_23 : f32 to vector<8x64xf32>
    %21 = arith.maximumf %19, %20 : vector<8x64xf32>
    %22 = arith.truncf %21 : vector<8x64xf32> to vector<8x64xbf16>
    %23 = arith.extf %22 : vector<8x64xbf16> to vector<8x64xf32>
    %cst_24 = arith.constant 0.000000e+00 : f32
    %24 = vector.broadcast %cst_24 : f32 to vector<8x64xf32>
    %c9_i32 = arith.constant 9 : i32
    %25 = tpu.dynamic_rotate %23 by %c9_i32 dim 1 : vector<8x64xf32>, i32 -> vector<8x64xf32>
    %26 = vector.extract_strided_slice %2 {offsets = [0, 0], sizes = [1, 64], strides = [1, 1]} : vector<9x64xf32> to vector<1x64xf32>
    %27 = vector.broadcast %26 : vector<1x64xf32> to vector<8x64xf32>
    %28 = arith.mulf %25, %27 : vector<8x64xf32>
    %29 = vector.extract_strided_slice %1 {offsets = [0, 0], sizes = [8, 1], strides = [1, 1]} : vector<8x9xf32> to vector<8x1xf32>
    %30 = vector.broadcast %29 : vector<8x1xf32> to vector<8x64xf32>
    %31 = arith.mulf %28, %30 : vector<8x64xf32>
    %32 = arith.addf %24, %31 : vector<8x64xf32>
    %c8_i32 = arith.constant 8 : i32
    %33 = tpu.dynamic_rotate %23 by %c8_i32 dim 1 : vector<8x64xf32>, i32 -> vector<8x64xf32>
    %34 = vector.extract_strided_slice %2 {offsets = [1, 0], sizes = [1, 64], strides = [1, 1]} : vector<9x64xf32> to vector<1x64xf32>
    %35 = vector.broadcast %34 : vector<1x64xf32> to vector<8x64xf32>
    %36 = arith.mulf %33, %35 : vector<8x64xf32>
    %37 = vector.extract_strided_slice %1 {offsets = [0, 1], sizes = [8, 1], strides = [1, 1]} : vector<8x9xf32> to vector<8x1xf32>
    %38 = vector.broadcast %37 : vector<8x1xf32> to vector<8x64xf32>
    %39 = arith.mulf %36, %38 : vector<8x64xf32>
    %40 = arith.addf %32, %39 : vector<8x64xf32>
    %c7_i32 = arith.constant 7 : i32
    %41 = tpu.dynamic_rotate %23 by %c7_i32 dim 1 : vector<8x64xf32>, i32 -> vector<8x64xf32>
    %42 = vector.extract_strided_slice %2 {offsets = [2, 0], sizes = [1, 64], strides = [1, 1]} : vector<9x64xf32> to vector<1x64xf32>
    %43 = vector.broadcast %42 : vector<1x64xf32> to vector<8x64xf32>
    %44 = arith.mulf %41, %43 : vector<8x64xf32>
    %45 = vector.extract_strided_slice %1 {offsets = [0, 2], sizes = [8, 1], strides = [1, 1]} : vector<8x9xf32> to vector<8x1xf32>
    %46 = vector.broadcast %45 : vector<8x1xf32> to vector<8x64xf32>
    %47 = arith.mulf %44, %46 : vector<8x64xf32>
    %48 = arith.addf %40, %47 : vector<8x64xf32>
    %c1_i32 = arith.constant 1 : i32
    %49 = tpu.dynamic_rotate %23 by %c1_i32 dim 1 : vector<8x64xf32>, i32 -> vector<8x64xf32>
    %50 = vector.extract_strided_slice %2 {offsets = [3, 0], sizes = [1, 64], strides = [1, 1]} : vector<9x64xf32> to vector<1x64xf32>
    %51 = vector.broadcast %50 : vector<1x64xf32> to vector<8x64xf32>
    %52 = arith.mulf %49, %51 : vector<8x64xf32>
    %53 = vector.extract_strided_slice %1 {offsets = [0, 3], sizes = [8, 1], strides = [1, 1]} : vector<8x9xf32> to vector<8x1xf32>
    %54 = vector.broadcast %53 : vector<8x1xf32> to vector<8x64xf32>
    %55 = arith.mulf %52, %54 : vector<8x64xf32>
    %56 = arith.addf %48, %55 : vector<8x64xf32>
    %57 = vector.extract_strided_slice %2 {offsets = [4, 0], sizes = [1, 64], strides = [1, 1]} : vector<9x64xf32> to vector<1x64xf32>
    %58 = vector.broadcast %57 : vector<1x64xf32> to vector<8x64xf32>
    %59 = arith.mulf %23, %58 : vector<8x64xf32>
    %60 = vector.extract_strided_slice %1 {offsets = [0, 4], sizes = [8, 1], strides = [1, 1]} : vector<8x9xf32> to vector<8x1xf32>
    %61 = vector.broadcast %60 : vector<8x1xf32> to vector<8x64xf32>
    %62 = arith.mulf %59, %61 : vector<8x64xf32>
    %63 = arith.addf %56, %62 : vector<8x64xf32>
    %c63_i32 = arith.constant 63 : i32
    %64 = tpu.dynamic_rotate %23 by %c63_i32 dim 1 : vector<8x64xf32>, i32 -> vector<8x64xf32>
    %65 = vector.extract_strided_slice %2 {offsets = [5, 0], sizes = [1, 64], strides = [1, 1]} : vector<9x64xf32> to vector<1x64xf32>
    %66 = vector.broadcast %65 : vector<1x64xf32> to vector<8x64xf32>
    %67 = arith.mulf %64, %66 : vector<8x64xf32>
    %68 = vector.extract_strided_slice %1 {offsets = [0, 5], sizes = [8, 1], strides = [1, 1]} : vector<8x9xf32> to vector<8x1xf32>
    %69 = vector.broadcast %68 : vector<8x1xf32> to vector<8x64xf32>
    %70 = arith.mulf %67, %69 : vector<8x64xf32>
    %71 = arith.addf %63, %70 : vector<8x64xf32>
    %c57_i32 = arith.constant 57 : i32
    %72 = tpu.dynamic_rotate %23 by %c57_i32 dim 1 : vector<8x64xf32>, i32 -> vector<8x64xf32>
    %73 = vector.extract_strided_slice %2 {offsets = [6, 0], sizes = [1, 64], strides = [1, 1]} : vector<9x64xf32> to vector<1x64xf32>
    %74 = vector.broadcast %73 : vector<1x64xf32> to vector<8x64xf32>
    %75 = arith.mulf %72, %74 : vector<8x64xf32>
    %76 = vector.extract_strided_slice %1 {offsets = [0, 6], sizes = [8, 1], strides = [1, 1]} : vector<8x9xf32> to vector<8x1xf32>
    %77 = vector.broadcast %76 : vector<8x1xf32> to vector<8x64xf32>
    %78 = arith.mulf %75, %77 : vector<8x64xf32>
    %79 = arith.addf %71, %78 : vector<8x64xf32>
    %c56_i32 = arith.constant 56 : i32
    %80 = tpu.dynamic_rotate %23 by %c56_i32 dim 1 : vector<8x64xf32>, i32 -> vector<8x64xf32>
    %81 = vector.extract_strided_slice %2 {offsets = [7, 0], sizes = [1, 64], strides = [1, 1]} : vector<9x64xf32> to vector<1x64xf32>
    %82 = vector.broadcast %81 : vector<1x64xf32> to vector<8x64xf32>
    %83 = arith.mulf %80, %82 : vector<8x64xf32>
    %84 = vector.extract_strided_slice %1 {offsets = [0, 7], sizes = [8, 1], strides = [1, 1]} : vector<8x9xf32> to vector<8x1xf32>
    %85 = vector.broadcast %84 : vector<8x1xf32> to vector<8x64xf32>
    %86 = arith.mulf %83, %85 : vector<8x64xf32>
    %87 = arith.addf %79, %86 : vector<8x64xf32>
    %c55_i32 = arith.constant 55 : i32
    %88 = tpu.dynamic_rotate %23 by %c55_i32 dim 1 : vector<8x64xf32>, i32 -> vector<8x64xf32>
    %89 = vector.extract_strided_slice %2 {offsets = [8, 0], sizes = [1, 64], strides = [1, 1]} : vector<9x64xf32> to vector<1x64xf32>
    %90 = vector.broadcast %89 : vector<1x64xf32> to vector<8x64xf32>
    %91 = arith.mulf %88, %90 : vector<8x64xf32>
    %92 = vector.extract_strided_slice %1 {offsets = [0, 8], sizes = [8, 1], strides = [1, 1]} : vector<8x9xf32> to vector<8x1xf32>
    %93 = vector.broadcast %92 : vector<8x1xf32> to vector<8x64xf32>
    %94 = arith.mulf %91, %93 : vector<8x64xf32>
    %95 = arith.addf %87, %94 : vector<8x64xf32>
    %96 = vector.broadcast %7 : vector<8x1xf32> to vector<8x64xf32>
    %97 = arith.mulf %95, %96 : vector<8x64xf32>
    %98 = vector.broadcast %8 : vector<8x1xf32> to vector<8x64xf32>
    %99 = arith.addf %97, %98 : vector<8x64xf32>
    %100 = arith.truncf %99 : vector<8x64xf32> to vector<8x64xbf16>
    %cst_25 = arith.constant dense<0.000000e+00> : vector<16x64xf32>
    %101 = tpu.matmul %3, %100, %cst_25 {dimension_numbers = #tpu.dot_dimension_numbers<[1], [0], [0], [1], [0, 0, 1, 1], [], []>} : vector<16x8xbf16>, vector<8x64xbf16>, vector<16x64xf32> -> vector<16x64xf32>
    %102 = vector.broadcast %9 : vector<16x1xf32> to vector<16x64xf32>
    %103 = arith.mulf %101, %102 : vector<16x64xf32>
    %104 = vector.broadcast %10 : vector<16x1xf32> to vector<16x64xf32>
    %105 = arith.addf %103, %104 : vector<16x64xf32>
    %cst_26 = arith.constant 0.000000e+00 : f32
    %106 = vector.broadcast %cst_26 : f32 to vector<16x64xf32>
    %107 = arith.maximumf %105, %106 : vector<16x64xf32>
    %108 = vector.extract_strided_slice %13 {offsets = [0, 0], sizes = [8, 64], strides = [1, 1]} : vector<16x64xbf16> to vector<8x64xbf16>
    %cst_27 = arith.constant dense<0.000000e+00> : vector<16x64xf32>
    %109 = tpu.matmul %4, %108, %cst_27 {dimension_numbers = #tpu.dot_dimension_numbers<[1], [0], [0], [1], [0, 0, 1, 1], [], []>} : vector<16x8xbf16>, vector<8x64xbf16>, vector<16x64xf32> -> vector<16x64xf32>
    %110 = arith.addf %109, %107 : vector<16x64xf32>
    %111 = arith.truncf %110 : vector<16x64xf32> to vector<16x64xbf16>
    %112 = arith.index_cast %c0_i32 : i32 to index
    %c0_28 = arith.constant 0 : index
    %c0_29 = arith.constant 0 : index
    %113 = vector.load %arg13[%112, %c0_28, %c0_29] : memref<1x16x64xbf16, #tpu.memory_space<vmem>>, vector<1x16x64xbf16>
    %114 = vector.shape_cast %113 : vector<1x16x64xbf16> to vector<16x64xbf16>
    %115 = vector.shape_cast %111 : vector<16x64xbf16> to vector<1x16x64xbf16>
    tpu.vector_store %arg13[%112, %c0_28, %c0_29], %115 {strides = array<i32>} : memref<1x16x64xbf16, #tpu.memory_space<vmem>>, vector<1x16x64xbf16>,
    %c1_i32_30 = arith.constant 1 : i32
    return
  }
  func.func @transform_0(%arg0: i32) -> (i32, i32, i32) {
    %c0_i32 = arith.constant 0 : i32
    %c0_i32_0 = arith.constant 0 : i32
    %c0_i32_1 = arith.constant 0 : i32
    return %arg0, %c0_i32, %c0_i32_0 : i32, i32, i32
  }
  func.func @transform_1(%arg0: i32) -> (i32, i32) {
    %c0_i32 = arith.constant 0 : i32
    %c0_i32_0 = arith.constant 0 : i32
    %c0_i32_1 = arith.constant 0 : i32
    return %c0_i32, %c0_i32_0 : i32, i32
  }
  func.func @transform_2(%arg0: i32) -> (i32, i32) {
    %c0_i32 = arith.constant 0 : i32
    %c0_i32_0 = arith.constant 0 : i32
    %c0_i32_1 = arith.constant 0 : i32
    return %c0_i32, %c0_i32_0 : i32, i32
  }
  func.func @transform_3(%arg0: i32) -> (i32, i32) {
    %c0_i32 = arith.constant 0 : i32
    %c0_i32_0 = arith.constant 0 : i32
    %c0_i32_1 = arith.constant 0 : i32
    return %c0_i32, %c0_i32_0 : i32, i32
  }
  func.func @transform_4(%arg0: i32) -> (i32, i32) {
    %c0_i32 = arith.constant 0 : i32
    %c0_i32_0 = arith.constant 0 : i32
    %c0_i32_1 = arith.constant 0 : i32
    return %c0_i32, %c0_i32_0 : i32, i32
  }
  func.func @transform_5(%arg0: i32) -> (i32, i32) {
    %c0_i32 = arith.constant 0 : i32
    %c0_i32_0 = arith.constant 0 : i32
    %c0_i32_1 = arith.constant 0 : i32
    return %c0_i32, %c0_i32_0 : i32, i32
  }
  func.func @transform_6(%arg0: i32) -> (i32, i32) {
    %c0_i32 = arith.constant 0 : i32
    %c0_i32_0 = arith.constant 0 : i32
    %c0_i32_1 = arith.constant 0 : i32
    return %c0_i32, %c0_i32_0 : i32, i32
  }
  func.func @transform_7(%arg0: i32) -> (i32, i32) {
    %c0_i32 = arith.constant 0 : i32
    %c0_i32_0 = arith.constant 0 : i32
    %c0_i32_1 = arith.constant 0 : i32
    return %c0_i32, %c0_i32_0 : i32, i32
  }
  func.func @transform_8(%arg0: i32) -> (i32, i32) {
    %c0_i32 = arith.constant 0 : i32
    %c0_i32_0 = arith.constant 0 : i32
    %c0_i32_1 = arith.constant 0 : i32
    return %c0_i32, %c0_i32_0 : i32, i32
  }
  func.func @transform_9(%arg0: i32) -> (i32, i32) {
    %c0_i32 = arith.constant 0 : i32
    %c0_i32_0 = arith.constant 0 : i32
    %c0_i32_1 = arith.constant 0 : i32
    return %c0_i32, %c0_i32_0 : i32, i32
  }
  func.func @transform_10(%arg0: i32) -> (i32, i32) {
    %c0_i32 = arith.constant 0 : i32
    %c0_i32_0 = arith.constant 0 : i32
    %c0_i32_1 = arith.constant 0 : i32
    return %c0_i32, %c0_i32_0 : i32, i32
  }
  func.func @transform_11(%arg0: i32) -> (i32, i32) {
    %c0_i32 = arith.constant 0 : i32
    %c0_i32_0 = arith.constant 0 : i32
    %c0_i32_1 = arith.constant 0 : i32
    return %c0_i32, %c0_i32_0 : i32, i32
  }
  func.func @transform_12(%arg0: i32) -> (i32, i32, i32) {
    %c0_i32 = arith.constant 0 : i32
    %c0_i32_0 = arith.constant 0 : i32
    %c0_i32_1 = arith.constant 0 : i32
    return %arg0, %c0_i32, %c0_i32_0 : i32, i32, i32
  }
}

</mosaic_0001>

<llo_original>
// kernel: tpu_custom_call.1
$region0: #{tpu_custom_call.1}
  #allocation0 [shape = 'u32[]', space=smem, size = 0x4, offset = 0x4, fixed_abs, tag = 'smem constant byte address 0x4 - core index']
  #allocation1 [shape = 'u32[144,128]{1,0:T(1,128)}', space=vmem, size = 0x12000, scoped, tag = 'internal scratch']
  %s0 = inlined_call_operand.vmem [shape: bf16[2,16,64], index: 0, kind: input, shape index: {}]
  %s1 = inlined_call_operand.vmem [shape: bf16[8,8], index: 1, kind: input, shape index: {}]
  %s2 = inlined_call_operand.vmem [shape: f32[8,1], index: 2, kind: input, shape index: {}]
  %s3 = inlined_call_operand.vmem [shape: f32[8,1], index: 3, kind: input, shape index: {}]
  %s4 = inlined_call_operand.vmem [shape: f32[8,9], index: 4, kind: input, shape index: {}]
  %s5 = inlined_call_operand.vmem [shape: f32[9,64], index: 5, kind: input, shape index: {}]
  %s6 = inlined_call_operand.vmem [shape: f32[8,1], index: 6, kind: input, shape index: {}]
  %s7 = inlined_call_operand.vmem [shape: f32[8,1], index: 7, kind: input, shape index: {}]
  %s8 = inlined_call_operand.vmem [shape: bf16[16,8], index: 8, kind: input, shape index: {}]
  %s9 = inlined_call_operand.vmem [shape: bf16[16,8], index: 9, kind: input, shape index: {}]
  %s10 = inlined_call_operand.vmem [shape: f32[16,1], index: 10, kind: input, shape index: {}]
  %s11 = inlined_call_operand.vmem [shape: f32[16,1], index: 11, kind: input, shape index: {}]
  %s12 = inlined_call_operand.hbm [shape: bf16[2,16,64], index: 12, kind: output, shape index: {}]
  %s13 = sld [smem:[#allocation0]]
  $region81: #{tpu_custom_call.1} parent=0
    _
  %s15 = ssub.s32 1, %s13
  %s16 = scalar_select 0, %s15, %s13
  $region1: #{tpu_custom_call.1} parent=0
    #allocation2 [shape = 'u8[8192]{0}', space=vmem, size = 0x2000, scoped, tag = 'output window, operand 0']
    #allocation3 [shape = 's32[2]{0}', space=sflag, size = 0x8, scoped, tag = 'scoped memory for tpu_custom_call.1']
    %17 = vsyncpa [#allocation3], 0
    %s18 = scalar_lea.sflag [#allocation3], 1
    %19 = vsyncpa %s18, 0
    loop: start=0, step=1, limit=4
    $region2: #{tpu_custom_call.1} parent=1 // loop_pre_header
      _
    $region3: #{tpu_custom_call.1} parent=1 // loop_header
      %s21 = sphi 0, %s25
      %p22 = scmp.ge.s32.totalorder %s21, 4
      %s31 = sphi 0, %s33
      %s34 = sphi 0, %s31
      %s35 = sphi 0, %s34
      %s51 = sphi 0, %s35
      %s55 = sphi 0, %s55
      %s57 = sphi 0, %s55
      %s58 = sphi 0, %s57
      %s72 = sphi 0, %s58
      %s76 = sphi 0, %s76
      %s78 = sphi 0, %s76
      %s79 = sphi 0, %s78
      %s93 = sphi 0, %s79
      %s97 = sphi 0, %s97
      %s99 = sphi 0, %s97
      %s100 = sphi 0, %s99
      %s114 = sphi 0, %s100
      %s118 = sphi 0, %s118
      %s120 = sphi 0, %s118
      %s121 = sphi 0, %s120
      %s135 = sphi 0, %s121
      %s139 = sphi 0, %s139
      %s141 = sphi 0, %s139
      %s142 = sphi 0, %s141
      %s156 = sphi 0, %s142
      %s160 = sphi 0, %s160
      %s162 = sphi 0, %s160
      %s163 = sphi 0, %s162
      %s177 = sphi 0, %s163
      %s181 = sphi 0, %s181
      %s183 = sphi 0, %s181
      %s184 = sphi 0, %s183
      %s198 = sphi 0, %s184
      %s202 = sphi 0, %s202
      %s204 = sphi 0, %s202
      %s205 = sphi 0, %s204
      %s219 = sphi 0, %s205
      %s223 = sphi 0, %s223
      %s225 = sphi 0, %s223
      %s226 = sphi 0, %s225
      %s240 = sphi 0, %s226
      %s244 = sphi 0, %s244
      %s246 = sphi 0, %s244
      %s247 = sphi 0, %s246
      %s261 = sphi 0, %s247
      %s265 = sphi 0, %s265
      %s267 = sphi 0, %s265
      %s268 = sphi 0, %s267
      %s282 = sphi 0, %s268
      %s288 = sphi 0, %s290
      %s291 = sphi 0, %s288
      %s292 = sphi 0, %s291
      %s308 = sphi 0, %s292
    $region4: #{tpu_custom_call.1} parent=1 // loop_header_branch
      %24 = sbr.rel (%p22) target = $region8
    $region5: #{tpu_custom_call.1} parent=1 // loop_body
      %s26 = ssub.s32 %s21, 1
      %s27 = ssub.s32 %s21, 2
      %s28 = sadd.s32 %s21, 1
      %s29 = ssub.s32 %s21, %s28
      %p30 = scmp.eq.s32.totalorder %s29, 0
      %s32 = sadd.s32 %s31, 1
      %s33 = scalar_select %p30, %s31, %s32
      %p36 = pneg %p30
      %p37 = scmp.eq.s32.totalorder %s21, 1
      %p38 = por %p36, %p37
      %p39 = scmp.ne.s32.totalorder %s31, %s34
      %p40 = scmp.eq.s32.totalorder %s21, 0
      %p41 = por %p39, %p40
      %p42 = scmp.ne.s32.totalorder %s31, %s34
      %p43 = scmp.eq.s32.totalorder %s26, 1
      %p44 = por %p42, %p43
      %p45 = scmp.ne.s32.totalorder %s34, %s35
      %p46 = scmp.eq.s32.totalorder %s26, 0
      %p47 = por %p45, %p46
      %p48 = scmp.ne.s32.totalorder %s34, %s35
      %p49 = scmp.eq.s32.totalorder %s27, 1
      %p50 = por %p48, %p49
      %p52 = scmp.ne.s32.totalorder %s35, %s51
      %p53 = scmp.eq.s32.totalorder %s27, 0
      %p54 = por %p52, %p53
      %s56 = sadd.s32 %s55, 1
      %p59 = scmp.eq.s32.totalorder %s21, 1
      %p60 = scmp.ne.s32.totalorder %s55, %s57
      %p61 = scmp.eq.s32.totalorder %s21, 0
      %p62 = por %p60, %p61
      %p63 = scmp.ne.s32.totalorder %s55, %s57
      %p64 = scmp.eq.s32.totalorder %s26, 1
      %p65 = por %p63, %p64
      %p66 = scmp.ne.s32.totalorder %s57, %s58
      %p67 = scmp.eq.s32.totalorder %s26, 0
      %p68 = por %p66, %p67
      %p69 = scmp.ne.s32.totalorder %s57, %s58
      %p70 = scmp.eq.s32.totalorder %s27, 1
      %p71 = por %p69, %p70
      %p73 = scmp.ne.s32.totalorder %s58, %s72
      %p74 = scmp.eq.s32.totalorder %s27, 0
      %p75 = por %p73, %p74
      %s77 = sadd.s32 %s76, 1
      %p80 = scmp.eq.s32.totalorder %s21, 1
      %p81 = scmp.ne.s32.totalorder %s76, %s78
      %p82 = scmp.eq.s32.totalorder %s21, 0
      %p83 = por %p81, %p82
      %p84 = scmp.ne.s32.totalorder %s76, %s78
      %p85 = scmp.eq.s32.totalorder %s26, 1
      %p86 = por %p84, %p85
      %p87 = scmp.ne.s32.totalorder %s78, %s79
      %p88 = scmp.eq.s32.totalorder %s26, 0
      %p89 = por %p87, %p88
      %p90 = scmp.ne.s32.totalorder %s78, %s79
      %p91 = scmp.eq.s32.totalorder %s27, 1
      %p92 = por %p90, %p91
      %p94 = scmp.ne.s32.totalorder %s79, %s93
      %p95 = scmp.eq.s32.totalorder %s27, 0
      %p96 = por %p94, %p95
      %s98 = sadd.s32 %s97, 1
      %p101 = scmp.eq.s32.totalorder %s21, 1
      %p102 = scmp.ne.s32.totalorder %s97, %s99
      %p103 = scmp.eq.s32.totalorder %s21, 0
      %p104 = por %p102, %p103
      %p105 = scmp.ne.s32.totalorder %s97, %s99
      %p106 = scmp.eq.s32.totalorder %s26, 1
      %p107 = por %p105, %p106
      %p108 = scmp.ne.s32.totalorder %s99, %s100
      %p109 = scmp.eq.s32.totalorder %s26, 0
      %p110 = por %p108, %p109
      %p111 = scmp.ne.s32.totalorder %s99, %s100
      %p112 = scmp.eq.s32.totalorder %s27, 1
      %p113 = por %p111, %p112
      %p115 = scmp.ne.s32.totalorder %s100, %s114
      %p116 = scmp.eq.s32.totalorder %s27, 0
      %p117 = por %p115, %p116
      %s119 = sadd.s32 %s118, 1
      %p122 = scmp.eq.s32.totalorder %s21, 1
      %p123 = scmp.ne.s32.totalorder %s118, %s120
      %p124 = scmp.eq.s32.totalorder %s21, 0
      %p125 = por %p123, %p124
      %p126 = scmp.ne.s32.totalorder %s118, %s120
      %p127 = scmp.eq.s32.totalorder %s26, 1
      %p128 = por %p126, %p127
      %p129 = scmp.ne.s32.totalorder %s120, %s121
      %p130 = scmp.eq.s32.totalorder %s26, 0
      %p131 = por %p129, %p130
      %p132 = scmp.ne.s32.totalorder %s120, %s121
      %p133 = scmp.eq.s32.totalorder %s27, 1
      %p134 = por %p132, %p133
      %p136 = scmp.ne.s32.totalorder %s121, %s135
      %p137 = scmp.eq.s32.totalorder %s27, 0
      %p138 = por %p136, %p137
      %s140 = sadd.s32 %s139, 1
      %p143 = scmp.eq.s32.totalorder %s21, 1
      %p144 = scmp.ne.s32.totalorder %s139, %s141
      %p145 = scmp.eq.s32.totalorder %s21, 0
      %p146 = por %p144, %p145
      %p147 = scmp.ne.s32.totalorder %s139, %s141
      %p148 = scmp.eq.s32.totalorder %s26, 1
      %p149 = por %p147, %p148
      %p150 = scmp.ne.s32.totalorder %s141, %s142
      %p151 = scmp.eq.s32.totalorder %s26, 0
      %p152 = por %p150, %p151
      %p153 = scmp.ne.s32.totalorder %s141, %s142
      %p154 = scmp.eq.s32.totalorder %s27, 1
      %p155 = por %p153, %p154
      %p157 = scmp.ne.s32.totalorder %s142, %s156
      %p158 = scmp.eq.s32.totalorder %s27, 0
      %p159 = por %p157, %p158
      %s161 = sadd.s32 %s160, 1
      %p164 = scmp.eq.s32.totalorder %s21, 1
      %p165 = scmp.ne.s32.totalorder %s160, %s162
      %p166 = scmp.eq.s32.totalorder %s21, 0
      %p167 = por %p165, %p166
      %p168 = scmp.ne.s32.totalorder %s160, %s162
      %p169 = scmp.eq.s32.totalorder %s26, 1
      %p170 = por %p168, %p169
      %p171 = scmp.ne.s32.totalorder %s162, %s163
      %p172 = scmp.eq.s32.totalorder %s26, 0
      %p173 = por %p171, %p172
      %p174 = scmp.ne.s32.totalorder %s162, %s163
      %p175 = scmp.eq.s32.totalorder %s27, 1
      %p176 = por %p174, %p175
      %p178 = scmp.ne.s32.totalorder %s163, %s177
      %p179 = scmp.eq.s32.totalorder %s27, 0
      %p180 = por %p178, %p179
      %s182 = sadd.s32 %s181, 1
      %p185 = scmp.eq.s32.totalorder %s21, 1
      %p186 = scmp.ne.s32.totalorder %s181, %s183
      %p187 = scmp.eq.s32.totalorder %s21, 0
      %p188 = por %p186, %p187
      %p189 = scmp.ne.s32.totalorder %s181, %s183
      %p190 = scmp.eq.s32.totalorder %s26, 1
      %p191 = por %p189, %p190
      %p192 = scmp.ne.s32.totalorder %s183, %s184
      %p193 = scmp.eq.s32.totalorder %s26, 0
      %p194 = por %p192, %p193
      %p195 = scmp.ne.s32.totalorder %s183, %s184
      %p196 = scmp.eq.s32.totalorder %s27, 1
      %p197 = por %p195, %p196
      %p199 = scmp.ne.s32.totalorder %s184, %s198
      %p200 = scmp.eq.s32.totalorder %s27, 0
      %p201 = por %p199, %p200
      %s203 = sadd.s32 %s202, 1
      %p206 = scmp.eq.s32.totalorder %s21, 1
      %p207 = scmp.ne.s32.totalorder %s202, %s204
      %p208 = scmp.eq.s32.totalorder %s21, 0
      %p209 = por %p207, %p208
      %p210 = scmp.ne.s32.totalorder %s202, %s204
      %p211 = scmp.eq.s32.totalorder %s26, 1
      %p212 = por %p210, %p211
      %p213 = scmp.ne.s32.totalorder %s204, %s205
      %p214 = scmp.eq.s32.totalorder %s26, 0
      %p215 = por %p213, %p214
      %p216 = scmp.ne.s32.totalorder %s204, %s205
      %p217 = scmp.eq.s32.totalorder %s27, 1
      %p218 = por %p216, %p217
      %p220 = scmp.ne.s32.totalorder %s205, %s219
      %p221 = scmp.eq.s32.totalorder %s27, 0
      %p222 = por %p220, %p221
      %s224 = sadd.s32 %s223, 1
      %p227 = scmp.eq.s32.totalorder %s21, 1
      %p228 = scmp.ne.s32.totalorder %s223, %s225
      %p229 = scmp.eq.s32.totalorder %s21, 0
      %p230 = por %p228, %p229
      %p231 = scmp.ne.s32.totalorder %s223, %s225
      %p232 = scmp.eq.s32.totalorder %s26, 1
      %p233 = por %p231, %p232
      %p234 = scmp.ne.s32.totalorder %s225, %s226
      %p235 = scmp.eq.s32.totalorder %s26, 0
      %p236 = por %p234, %p235
      %p237 = scmp.ne.s32.totalorder %s225, %s226
      %p238 = scmp.eq.s32.totalorder %s27, 1
      %p239 = por %p237, %p238
      %p241 = scmp.ne.s32.totalorder %s226, %s240
      %p242 = scmp.eq.s32.totalorder %s27, 0
      %p243 = por %p241, %p242
      %s245 = sadd.s32 %s244, 1
      %p248 = scmp.eq.s32.totalorder %s21, 1
      %p249 = scmp.ne.s32.totalorder %s244, %s246
      %p250 = scmp.eq.s32.totalorder %s21, 0
      %p251 = por %p249, %p250
      %p252 = scmp.ne.s32.totalorder %s244, %s246
      %p253 = scmp.eq.s32.totalorder %s26, 1
      %p254 = por %p252, %p253
      %p255 = scmp.ne.s32.totalorder %s246, %s247
      %p256 = scmp.eq.s32.totalorder %s26, 0
      %p257 = por %p255, %p256
      %p258 = scmp.ne.s32.totalorder %s246, %s247
      %p259 = scmp.eq.s32.totalorder %s27, 1
      %p260 = por %p258, %p259
      %p262 = scmp.ne.s32.totalorder %s247, %s261
      %p263 = scmp.eq.s32.totalorder %s27, 0
      %p264 = por %p262, %p263
      %s266 = sadd.s32 %s265, 1
      %p269 = scmp.eq.s32.totalorder %s21, 1
      %p270 = scmp.ne.s32.totalorder %s265, %s267
      %p271 = scmp.eq.s32.totalorder %s21, 0
      %p272 = por %p270, %p271
      %p273 = scmp.ne.s32.totalorder %s265, %s267
      %p274 = scmp.eq.s32.totalorder %s26, 1
      %p275 = por %p273, %p274
      %p276 = scmp.ne.s32.totalorder %s267, %s268
      %p277 = scmp.eq.s32.totalorder %s26, 0
      %p278 = por %p276, %p277
      %p279 = scmp.ne.s32.totalorder %s267, %s268
      %p280 = scmp.eq.s32.totalorder %s27, 1
      %p281 = por %p279, %p280
      %p283 = scmp.ne.s32.totalorder %s268, %s282
      %p284 = scmp.eq.s32.totalorder %s27, 0
      %p285 = por %p283, %p284
      %s286 = ssub.s32 %s21, %s28
      %p287 = scmp.eq.s32.totalorder %s286, 0
      %s289 = sadd.s32 %s288, 1
      %s290 = scalar_select %p287, %s288, %s289
      %p293 = pneg %p287
      %p294 = scmp.eq.s32.totalorder %s21, 1
      %p295 = por %p293, %p294
      %p296 = scmp.ne.s32.totalorder %s288, %s291
      %p297 = scmp.eq.s32.totalorder %s21, 0
      %p298 = por %p296, %p297
      %p299 = scmp.ne.s32.totalorder %s288, %s291
      %p300 = scmp.eq.s32.totalorder %s26, 1
      %p301 = por %p299, %p300
      %p302 = scmp.ne.s32.totalorder %s291, %s292
      %p303 = scmp.eq.s32.totalorder %s26, 0
      %p304 = por %p302, %p303
      %p305 = scmp.ne.s32.totalorder %s291, %s292
      %p306 = scmp.eq.s32.totalorder %s27, 1
      %p307 = por %p305, %p306
      %p309 = scmp.ne.s32.totalorder %s292, %s308
      %p310 = scmp.eq.s32.totalorder %s27, 0
      %p311 = por %p309, %p310
      %p312 = scmp.le.s32.totalorder 1, %s21
      %p313 = scmp.lt.s32.totalorder %s21, 3
      %p314 = pnand %p312, %p313
      %p315 = pneg %p314
      // Predicated region
      $region9: #{tpu_custom_call.1} parent=5 // pred_check
        _
      $region10: #{tpu_custom_call.1} parent=5 // pred_check_branch
        %317 = sbr.rel (%p314) target = $region12
      $region11: #{tpu_custom_call.1} parent=5 // pred_region
        %s318 = ssub.s32 %s21, 1
        // Predicated region
        $region13: #{tpu_custom_call.1} parent=11 // pred_check
          %p319 = pneg %p68
        $region14: #{tpu_custom_call.1} parent=11 // pred_check_branch
          %321 = sbr.rel (%p319) target = $region16
        $region15: #{tpu_custom_call.1} parent=11 // pred_region
          _
        $region16: #{tpu_custom_call.1} parent=11 // pred_fallthru
          _
        // Predicated region
        $region17: #{tpu_custom_call.1} parent=11 // pred_check
          %p322 = pneg %p89
        $region18: #{tpu_custom_call.1} parent=11 // pred_check_branch
          %324 = sbr.rel (%p322) target = $region20
        $region19: #{tpu_custom_call.1} parent=11 // pred_region
          _
        $region20: #{tpu_custom_call.1} parent=11 // pred_fallthru
          _
        // Predicated region
        $region21: #{tpu_custom_call.1} parent=11 // pred_check
          %p325 = pneg %p110
        $region22: #{tpu_custom_call.1} parent=11 // pred_check_branch
          %327 = sbr.rel (%p325) target = $region24
        $region23: #{tpu_custom_call.1} parent=11 // pred_region
          _
        $region24: #{tpu_custom_call.1} parent=11 // pred_fallthru
          _
        // Predicated region
        $region25: #{tpu_custom_call.1} parent=11 // pred_check
          %p328 = pneg %p131
        $region26: #{tpu_custom_call.1} parent=11 // pred_check_branch
          %330 = sbr.rel (%p328) target = $region28
        $region27: #{tpu_custom_call.1} parent=11 // pred_region
          _
        $region28: #{tpu_custom_call.1} parent=11 // pred_fallthru
          _
        // Predicated region
        $region29: #{tpu_custom_call.1} parent=11 // pred_check
          %p331 = pneg %p152
        $region30: #{tpu_custom_call.1} parent=11 // pred_check_branch
          %333 = sbr.rel (%p331) target = $region32
        $region31: #{tpu_custom_call.1} parent=11 // pred_region
          _
        $region32: #{tpu_custom_call.1} parent=11 // pred_fallthru
          _
        // Predicated region
        $region33: #{tpu_custom_call.1} parent=11 // pred_check
          %p334 = pneg %p173
        $region34: #{tpu_custom_call.1} parent=11 // pred_check_branch
          %336 = sbr.rel (%p334) target = $region36
        $region35: #{tpu_custom_call.1} parent=11 // pred_region
          _
        $region36: #{tpu_custom_call.1} parent=11 // pred_fallthru
          _
        // Predicated region
        $region37: #{tpu_custom_call.1} parent=11 // pred_check
          %p337 = pneg %p194
        $region38: #{tpu_custom_call.1} parent=11 // pred_check_branch
          %339 = sbr.rel (%p337) target = $region40
        $region39: #{tpu_custom_call.1} parent=11 // pred_region
          _
        $region40: #{tpu_custom_call.1} parent=11 // pred_fallthru
          _
        // Predicated region
        $region41: #{tpu_custom_call.1} parent=11 // pred_check
          %p340 = pneg %p215
        $region42: #{tpu_custom_call.1} parent=11 // pred_check_branch
          %342 = sbr.rel (%p340) target = $region44
        $region43: #{tpu_custom_call.1} parent=11 // pred_region
          _
        $region44: #{tpu_custom_call.1} parent=11 // pred_fallthru
          _
        // Predicated region
        $region45: #{tpu_custom_call.1} parent=11 // pred_check
          %p343 = pneg %p236
        $region46: #{tpu_custom_call.1} parent=11 // pred_check_branch
          %345 = sbr.rel (%p343) target = $region48
        $region47: #{tpu_custom_call.1} parent=11 // pred_region
          _
        $region48: #{tpu_custom_call.1} parent=11 // pred_fallthru
          _
        // Predicated region
        $region49: #{tpu_custom_call.1} parent=11 // pred_check
          %p346 = pneg %p257
        $region50: #{tpu_custom_call.1} parent=11 // pred_check_branch
          %348 = sbr.rel (%p346) target = $region52
        $region51: #{tpu_custom_call.1} parent=11 // pred_region
          _
        $region52: #{tpu_custom_call.1} parent=11 // pred_fallthru
          _
        // Predicated region
        $region53: #{tpu_custom_call.1} parent=11 // pred_check
          %p349 = pneg %p278
        $region54: #{tpu_custom_call.1} parent=11 // pred_check_branch
          %351 = sbr.rel (%p349) target = $region56
        $region55: #{tpu_custom_call.1} parent=11 // pred_region
          _
        $region56: #{tpu_custom_call.1} parent=11 // pred_fallthru
          _
      $region12: #{tpu_custom_call.1} parent=5 // pred_fallthru
        _
      %p352 = scmp.lt.s32.totalorder %s21, 2
      // Predicated region
      $region57: #{tpu_custom_call.1} parent=5 // pred_check
        %p353 = pneg %p352
      $region58: #{tpu_custom_call.1} parent=5 // pred_check_branch
        %355 = sbr.rel (%p353) target = $region60
      $region59: #{tpu_custom_call.1} parent=5 // pred_region
        // Predicated region
        $region61: #{tpu_custom_call.1} parent=59 // pred_check
          %p356 = pneg %p41
        $region62: #{tpu_custom_call.1} parent=59 // pred_check_branch
          %358 = sbr.rel (%p356) target = $region64
        $region63: #{tpu_custom_call.1} parent=59 // pred_region
          %p359 = scmp.lt.s32.totalorder %s21, 1
          %s360 = scalar_select %p359, %s21, 1
          %s361 = smul.addr %s360, 2
          %s362 = smul.addr %s361, 4
          %s363 = scalar_lea.vmem %s0, %s362
        $region64: #{tpu_custom_call.1} parent=59 // pred_fallthru
          _
      $region60: #{tpu_custom_call.1} parent=5 // pred_fallthru
        _
      %p364 = scmp.le.s32.totalorder 1, %s21
      %p365 = scmp.lt.s32.totalorder %s21, 3
      %p366 = pnand %p364, %p365
      %p367 = pneg %p366
      // Predicated region
      $region65: #{tpu_custom_call.1} parent=5 // pred_check
        _
      $region66: #{tpu_custom_call.1} parent=5 // pred_check_branch
        %369 = sbr.rel (%p366) target = $region68
      $region67: #{tpu_custom_call.1} parent=5 // pred_region
        %s370 = ssub.s32 %s21, 1
        %p371 = scmp.lt.s32.totalorder %s26, 1
        %s372 = scalar_select %p371, %s26, 1
        %s373 = smul.addr %s372, 2
        %s374 = smul.addr %s373, 4
        %s375 = scalar_lea.vmem %s0, %s374
        %p376 = pneg %p47
        %p377 = pneg %p44
        %p378 = pneg %p68
        %p379 = pneg %p65
        %p380 = pneg %p89
        %p381 = pneg %p86
        %p382 = pneg %p110
        %p383 = pneg %p107
        %p384 = pneg %p131
        %p385 = pneg %p128
        %p386 = pneg %p152
        %p387 = pneg %p149
        %p388 = pneg %p173
        %p389 = pneg %p170
        %p390 = pneg %p194
        %p391 = pneg %p191
        %p392 = pneg %p215
        %p393 = pneg %p212
        %p394 = pneg %p236
        %p395 = pneg %p233
        %p396 = pneg %p257
        %p397 = pneg %p254
        %p398 = pneg %p278
        %p399 = pneg %p275
        %p400 = pneg %p304
        %p401 = pneg %p301
        %s402 = sand.u32 %s291, 1
        %s403 = scalar_lea.sflag [#allocation3], %s402
        %s404 = sand.u32 %s291, 1
        %s405 = smul.addr %s404, 8
        %s406 = scalar_lea.vmem [#allocation2], %s405
        %p407 = scmp.lt.s32.totalorder %s26, 1
        %s408 = scalar_select %p407, %s26, 1
        %s409 = smul.addr %s408, 2
        %s410 = smul.addr %s409, 4
        %s411 = scalar_lea.vmem %s0, %s410
        %v413 = vld [vmem:[%s1] sm:$0xf]
        %v414 = vld [vmem:[%s4] sm:$0xff]
        %v415 = vld [vmem:[%s5] sm:$0xff]
        %v416 = vld [vmem:[%s5 + $0x8] sm:$0x1]
        %v417 = vld [vmem:[%s8] sm:$0xf]
        %v418 = vld [vmem:[%s8 + $0x4] sm:$0xf]
        %v419 = vld [vmem:[%s9] sm:$0xf]
        %v420 = vld [vmem:[%s9 + $0x4] sm:$0xf]
        %v421 = vld [vmem:[%s2] sm:$0xff]
        %v422 = vld [vmem:[%s3] sm:$0xff]
        %v423 = vld [vmem:[%s6] sm:$0xff]
        %v424 = vld [vmem:[%s7] sm:$0xff]
        %v425 = vld [vmem:[%s10] sm:$0xff]
        %v426 = vld [vmem:[%s10 + $0x8] sm:$0xff]
        %v427 = vld [vmem:[%s11] sm:$0xff]
        %v428 = vld [vmem:[%s11 + $0x8] sm:$0xff]
        %v429 = vld [vmem:[%s411] sm:$0xf]
        %v430 = vld [vmem:[%s411 + $0x4] sm:$0xf]
        %vm431 = vcmask 64512
        %v433 = vsel %vm431, %v413, 0
        %vm435 = vcmask 1043456
        %v437 = vsel %vm435, %v430, 0
        %439 = vmatprep.subr.bf16.mxu0 0
        %440 = vmatpush1.bf16.msra.mxu0 %v437
        %441 = vmatprep.subr.bf16.mxu0 0
        %442 = vmatpush1.bf16.msra.mxu0 0
        %443 = vmatprep.subr.bf16.mxu0 0
        %444 = vmatpush1.bf16.msra.mxu0 0
        %445 = vmatprep.subr.bf16.mxu0 0
        %446 = vmatpush1.bf16.msra.mxu0 0
        %447 = vmatprep.subr.bf16.mxu0 0
        %448 = vmatpush1.bf16.msra.mxu0 0
        %449 = vmatprep.subr.bf16.mxu0 0
        %450 = vmatpush1.bf16.msra.mxu0 0
        %451 = vmatprep.subr.bf16.mxu0 0
        %452 = vmatpush1.bf16.msra.mxu0 0
        %453 = vmatprep.subr.bf16.mxu0 0
        %454 = vmatpush1.bf16.msra.mxu0 0
        %455 = vmatprep.subr.bf16.mxu0 0
        %456 = vmatpush1.bf16.msra.mxu0 0
        %457 = vmatprep.subr.bf16.mxu0 0
        %458 = vmatpush1.bf16.msra.mxu0 0
        %459 = vmatprep.subr.bf16.mxu0 0
        %460 = vmatpush1.bf16.msra.mxu0 0
        %461 = vmatprep.subr.bf16.mxu0 0
        %462 = vmatpush1.bf16.msra.mxu0 0
        %463 = vmatprep.subr.bf16.mxu0 0
        %464 = vmatpush1.bf16.msra.mxu0 0
        %465 = vmatprep.subr.bf16.mxu0 0
        %466 = vmatpush1.bf16.msra.mxu0 0
        %467 = vmatprep.subr.bf16.mxu0 0
        %468 = vmatpush1.bf16.msra.mxu0 0
        %469 = vmatprep.subr.bf16.mxu0 0
        %470 = vmatpush1.bf16.msra.mxu0 0
        %471 = vmatprep.mubr.bf16.mxu0 0
        %472 = vmatmul.mubr.bf16.gmra.mrb[0].mxu0 %v433
        %v473 = vpop.f32.mrb[0].mxu0
        %v474 = vadd.f32 0.0, %v473
        %v475 = vpop.f32.mrb[0].mxu0
        %v476 = vpop.f32.mrb[0].mxu0
        %v477 = vpop.f32.mrb[0].mxu0
        %478 = vdwg.mxu0
        %480 = vset.pattern.permute.xlu0 0
        %481 = vperm.xlu0 %480, %v421
        %v482 = vpop.permute.xlu0 %481
        %v484 = vmul.f32 %v474, %v482
        %486 = vset.pattern.permute.xlu0 0
        %487 = vperm.xlu0 %486, %v422
        %v488 = vpop.permute.xlu0 %487
        %v490 = vadd.f32 %v484, %v488
        %v491 = vmax.f32 %v490, 0.0
        %v492 = vpack.c.bf16 %v491, %v491
        %v493 = vunpack.c.l.bf16 %v492
        %vm494 = vcmask 1048064
        %495 = vrot.lane.b32.xlu0 %v493, 64
        %v496 = vpop.permute.xlu0 %495
        %v497 = vsel %vm494, %v496, %v493
        %498 = vrot.lane.b32.xlu0 %v497, 64
        %v499 = vpop.permute.xlu0 %498
        %v500 = vsel %vm494, %v499, %v493
        %v501 = vlaneseq
        %v502 = vshrl.u32 %v501, 7
        %v503 = vsub.s32 0, %v502
        %v504 = vrot.slane %v415, %v503
        %506 = vrot.lane.b32.xlu0 %v504, 55
        %v507 = vpop.permute.xlu0 %506
        %v509 = vmul.f32 %v500, %v507
        %511 = vset.pattern.permute.xlu0 0
        %512 = vperm.xlu0 %511, %v414
        %v513 = vpop.permute.xlu0 %512
        %v515 = vmul.f32 %v509, %v513
        %v516 = vadd.f32 %v515, 0.0
        %v517 = vlaneseq
        %v518 = vshrl.u32 %v517, 7
        %v519 = vsub.s32 1, %v518
        %v520 = vrot.slane %v415, %v519
        %522 = vrot.lane.b32.xlu0 %v520, 56
        %v523 = vpop.permute.xlu0 %522
        %v525 = vmul.f32 %v500, %v523
        %526 = vset.pattern.permute.xlu0 1
        %527 = vperm.xlu0 %526, %v414
        %v528 = vpop.permute.xlu0 %527
        %v530 = vmul.f32 %v525, %v528
        %532 = vrot.lane.b32.xlu0 %v530, 127
        %v533 = vpop.permute.xlu0 %532
        %v535 = vadd.f32 %v516, %v533
        %v536 = vlaneseq
        %v537 = vshrl.u32 %v536, 7
        %v538 = vsub.s32 2, %v537
        %v539 = vrot.slane %v415, %v538
        %541 = vrot.lane.b32.xlu0 %v539, 57
        %v542 = vpop.permute.xlu0 %541
        %v544 = vmul.f32 %v500, %v542
        %545 = vset.pattern.permute.xlu0 2
        %546 = vperm.xlu0 %545, %v414
        %v547 = vpop.permute.xlu0 %546
        %v549 = vmul.f32 %v544, %v547
        %551 = vrot.lane.b32.xlu0 %v549, 126
        %v552 = vpop.permute.xlu0 %551
        %v554 = vadd.f32 %v535, %v552
        %v555 = vlaneseq
        %v556 = vshrl.u32 %v555, 7
        %v557 = vsub.s32 3, %v556
        %v558 = vrot.slane %v415, %v557
        %560 = vrot.lane.b32.xlu0 %v558, 63
        %v561 = vpop.permute.xlu0 %560
        %v563 = vmul.f32 %v500, %v561
        %564 = vset.pattern.permute.xlu0 3
        %565 = vperm.xlu0 %564, %v414
        %v566 = vpop.permute.xlu0 %565
        %v568 = vmul.f32 %v563, %v566
        %570 = vrot.lane.b32.xlu0 %v568, 120
        %v571 = vpop.permute.xlu0 %570
        %v573 = vadd.f32 %v554, %v571
        %v574 = vlaneseq
        %v575 = vshrl.u32 %v574, 7
        %v576 = vsub.s32 4, %v575
        %v577 = vrot.slane %v415, %v576
        %v578 = vmul.f32 %v493, %v577
        %579 = vset.pattern.permute.xlu0 4
        %580 = vperm.xlu0 %579, %v414
        %v581 = vpop.permute.xlu0 %580
        %v583 = vmul.f32 %v578, %v581
        %585 = vrot.lane.b32.xlu0 %v583, 55
        %v586 = vpop.permute.xlu0 %585
        %v588 = vadd.f32 %v573, %v586
        %v589 = vlaneseq
        %v590 = vshrl.u32 %v589, 7
        %v591 = vsub.s32 5, %v590
        %v592 = vrot.slane %v415, %v591
        %594 = vrot.lane.b32.xlu0 %v592, 1
        %v595 = vpop.permute.xlu0 %594
        %v597 = vmul.f32 %v500, %v595
        %598 = vset.pattern.permute.xlu0 5
        %599 = vperm.xlu0 %598, %v414
        %v600 = vpop.permute.xlu0 %599
        %v602 = vmul.f32 %v597, %v600
        %604 = vrot.lane.b32.xlu0 %v602, 54
        %v605 = vpop.permute.xlu0 %604
        %v607 = vadd.f32 %v588, %v605
        %v608 = vlaneseq
        %v609 = vshrl.u32 %v608, 7
        %v610 = vsub.s32 6, %v609
        %v611 = vrot.slane %v415, %v610
        %613 = vrot.lane.b32.xlu0 %v611, 7
        %v614 = vpop.permute.xlu0 %613
        %v616 = vmul.f32 %v500, %v614
        %617 = vset.pattern.permute.xlu0 6
        %618 = vperm.xlu0 %617, %v414
        %v619 = vpop.permute.xlu0 %618
        %v621 = vmul.f32 %v616, %v619
        %623 = vrot.lane.b32.xlu0 %v621, 48
        %v624 = vpop.permute.xlu0 %623
        %v626 = vadd.f32 %v607, %v624
        %v627 = vlaneseq
        %v628 = vshrl.u32 %v627, 7
        %v629 = vsub.s32 7, %v628
        %v630 = vrot.slane %v415, %v629
        %632 = vrot.lane.b32.xlu0 %v630, 8
        %v633 = vpop.permute.xlu0 %632
        %v635 = vmul.f32 %v500, %v633
        %636 = vset.pattern.permute.xlu0 7
        %637 = vperm.xlu0 %636, %v414
        %v638 = vpop.permute.xlu0 %637
        %v640 = vmul.f32 %v635, %v638
        %642 = vrot.lane.b32.xlu0 %v640, 47
        %v643 = vpop.permute.xlu0 %642
        %v645 = vadd.f32 %v626, %v643
        %v646 = vlaneseq
        %v647 = vshrl.u32 %v646, 7
        %v648 = vsub.s32 0, %v647
        %v649 = vrot.slane %v416, %v648
        %651 = vrot.lane.b32.xlu0 %v649, 9
        %v652 = vpop.permute.xlu0 %651
        %v654 = vmul.f32 %v500, %v652
        %655 = vset.pattern.permute.xlu0 8
        %656 = vperm.xlu0 %655, %v414
        %v657 = vpop.permute.xlu0 %656
        %v659 = vmul.f32 %v654, %v657
        %661 = vrot.lane.b32.xlu0 %v659, 46
        %v662 = vpop.permute.xlu0 %661
        %v664 = vadd.f32 %v645, %v662
        %666 = vset.pattern.permute.xlu0 0
        %667 = vperm.xlu0 %666, %v423
        %v668 = vpop.permute.xlu0 %667
        %v670 = vmul.f32 %v664, %v668
        %672 = vset.pattern.permute.xlu0 0
        %673 = vperm.xlu0 %672, %v424
        %v674 = vpop.permute.xlu0 %673
        %v676 = vadd.f32 %v670, %v674
        %v677 = vpack.c.bf16 %v676, %v676
        %v680 = vunpack.c.l.b16 %v417
        %v681 = vunpack.c.l.b16 %v418
        %v682 = vpack.c.b16 %v681, %v680
        %684 = vrot.lane.b32.xlu0 %v677, 73
        %v685 = vpop.permute.xlu0 %684
        %v687 = vsel %vm431, %v682, 0
        %v690 = vsel %vm435, %v685, 0
        %692 = vmatprep.subr.bf16.mxu0 0
        %693 = vmatpush1.bf16.msra.mxu0 %v690
        %694 = vmatprep.subr.bf16.mxu0 0
        %695 = vmatpush1.bf16.msra.mxu0 0
        %696 = vmatprep.subr.bf16.mxu0 0
        %697 = vmatpush1.bf16.msra.mxu0 0
        %698 = vmatprep.subr.bf16.mxu0 0
        %699 = vmatpush1.bf16.msra.mxu0 0
        %700 = vmatprep.subr.bf16.mxu0 0
        %701 = vmatpush1.bf16.msra.mxu0 0
        %702 = vmatprep.subr.bf16.mxu0 0
        %703 = vmatpush1.bf16.msra.mxu0 0
        %704 = vmatprep.subr.bf16.mxu0 0
        %705 = vmatpush1.bf16.msra.mxu0 0
        %706 = vmatprep.subr.bf16.mxu0 0
        %707 = vmatpush1.bf16.msra.mxu0 0
        %708 = vmatprep.subr.bf16.mxu0 0
        %709 = vmatpush1.bf16.msra.mxu0 0
        %710 = vmatprep.subr.bf16.mxu0 0
        %711 = vmatpush1.bf16.msra.mxu0 0
        %712 = vmatprep.subr.bf16.mxu0 0
        %713 = vmatpush1.bf16.msra.mxu0 0
        %714 = vmatprep.subr.bf16.mxu0 0
        %715 = vmatpush1.bf16.msra.mxu0 0
        %716 = vmatprep.subr.bf16.mxu0 0
        %717 = vmatpush1.bf16.msra.mxu0 0
        %718 = vmatprep.subr.bf16.mxu0 0
        %719 = vmatpush1.bf16.msra.mxu0 0
        %720 = vmatprep.subr.bf16.mxu0 0
        %721 = vmatpush1.bf16.msra.mxu0 0
        %722 = vmatprep.subr.bf16.mxu0 0
        %723 = vmatpush1.bf16.msra.mxu0 0
        %724 = vmatprep.mubr.bf16.mxu0 0
        %725 = vmatmul.mubr.bf16.gmra.mrb[0].mxu0 %v687
        %v726 = vpop.f32.mrb[0].mxu0
        %v727 = vadd.f32 0.0, %v726
        %v728 = vpop.f32.mrb[0].mxu0
        %v729 = vpop.f32.mrb[0].mxu0
        %v730 = vadd.f32 0.0, %v729
        %v731 = vpop.f32.mrb[0].mxu0
        %732 = vdwg.mxu0
        %734 = vset.pattern.permute.xlu0 0
        %735 = vperm.xlu0 %734, %v425
        %v736 = vpop.permute.xlu0 %735
        %739 = vset.pattern.permute.xlu0 0
        %740 = vperm.xlu0 %739, %v426
        %v741 = vpop.permute.xlu0 %740
        %v743 = vmul.f32 %v727, %v736
        %v744 = vmul.f32 %v730, %v741
        %746 = vset.pattern.permute.xlu0 0
        %747 = vperm.xlu0 %746, %v427
        %v748 = vpop.permute.xlu0 %747
        %751 = vset.pattern.permute.xlu0 0
        %752 = vperm.xlu0 %751, %v428
        %v753 = vpop.permute.xlu0 %752
        %v755 = vadd.f32 %v743, %v748
        %v756 = vadd.f32 %v744, %v753
        %v757 = vmax.f32 %v755, 0.0
        %v758 = vmax.f32 %v756, 0.0
        %v761 = vunpack.c.l.b16 %v419
        %v762 = vunpack.c.l.b16 %v420
        %v763 = vpack.c.b16 %v762, %v761
        %v765 = vsel %vm431, %v763, 0
        %v768 = vsel %vm435, %v429, 0
        %770 = vmatprep.subr.bf16.mxu0 0
        %771 = vmatpush1.bf16.msra.mxu0 %v768
        %772 = vmatprep.subr.bf16.mxu0 0
        %773 = vmatpush1.bf16.msra.mxu0 0
        %774 = vmatprep.subr.bf16.mxu0 0
        %775 = vmatpush1.bf16.msra.mxu0 0
        %776 = vmatprep.subr.bf16.mxu0 0
        %777 = vmatpush1.bf16.msra.mxu0 0
        %778 = vmatprep.subr.bf16.mxu0 0
        %779 = vmatpush1.bf16.msra.mxu0 0
        %780 = vmatprep.subr.bf16.mxu0 0
        %781 = vmatpush1.bf16.msra.mxu0 0
        %782 = vmatprep.subr.bf16.mxu0 0
        %783 = vmatpush1.bf16.msra.mxu0 0
        %784 = vmatprep.subr.bf16.mxu0 0
        %785 = vmatpush1.bf16.msra.mxu0 0
        %786 = vmatprep.subr.bf16.mxu0 0
        %787 = vmatpush1.bf16.msra.mxu0 0
        %788 = vmatprep.subr.bf16.mxu0 0
        %789 = vmatpush1.bf16.msra.mxu0 0
        %790 = vmatprep.subr.bf16.mxu0 0
        %791 = vmatpush1.bf16.msra.mxu0 0
        %792 = vmatprep.subr.bf16.mxu0 0
        %793 = vmatpush1.bf16.msra.mxu0 0
        %794 = vmatprep.subr.bf16.mxu0 0
        %795 = vmatpush1.bf16.msra.mxu0 0
        %796 = vmatprep.subr.bf16.mxu0 0
        %797 = vmatpush1.bf16.msra.mxu0 0
        %798 = vmatprep.subr.bf16.mxu0 0
        %799 = vmatpush1.bf16.msra.mxu0 0
        %800 = vmatprep.subr.bf16.mxu0 0
        %801 = vmatpush1.bf16.msra.mxu0 0
        %802 = vmatprep.mubr.bf16.mxu0 0
        %803 = vmatmul.mubr.bf16.gmra.mrb[0].mxu0 %v765
        %v804 = vpop.f32.mrb[0].mxu0
        %v805 = vadd.f32 %v757, %v804
        %v806 = vpop.f32.mrb[0].mxu0
        %v807 = vpop.f32.mrb[0].mxu0
        %v808 = vadd.f32 %v758, %v807
        %v809 = vpop.f32.mrb[0].mxu0
        %810 = vdwg.mxu0
        %v811 = vpack.c.bf16 %v808, %v805
        %v813 = vunpack.c.l.b16 %v811
        %v814 = vunpack.c.h.b16 %v811
        %v815 = vpack.c.b16 %v813, %v813
        %v816 = vpack.c.b16 %v814, %v814
        %vm819 = vcmask 519168
        %820 = vst.msk [vmem:[%s406] sm:$0xf] %vm819, %v815
        %821 = vst.msk [vmem:[%s406 + $0x4] sm:$0xf] %vm819, %v816
        %s822 = sand.u32 %s291, 1
        %s823 = scalar_lea.sflag [#allocation3], %s822
        %s824 = sand.u32 %s291, 1
        %s825 = smul.addr %s824, 8
        %s826 = scalar_lea.vmem [#allocation2], %s825
        // Predicated region
        $region69: #{tpu_custom_call.1} parent=67 // pred_check
          %p827 = pneg %p301
        $region70: #{tpu_custom_call.1} parent=67 // pred_check_branch
          %829 = sbr.rel (%p827) target = $region72
        $region71: #{tpu_custom_call.1} parent=67 // pred_region
          %s831 = ssub.s32 128, 128
          %832 = vsyncadd %s823, %s831
          %s833 = smul.addr %s26, 2
          %s834 = smul.addr %s833, 64
          %s835 = scalar_lea.hbm %s12, %s834
          %s836 = sshll.u32 %s826, 4
          %s837 = int_to_ptr.vmem [resolvable:$true] %s836
          %842 = dma.vmem_to_hbm [thread:$0]  %s837, 128, %s835, %s823, 64, 64, 4
        $region72: #{tpu_custom_call.1} parent=67 // pred_fallthru
          _
      $region68: #{tpu_custom_call.1} parent=5 // pred_fallthru
        _
      %p843 = scmp.le.s32.totalorder 2, %s21
      // Predicated region
      $region73: #{tpu_custom_call.1} parent=5 // pred_check
        %p844 = pneg %p843
      $region74: #{tpu_custom_call.1} parent=5 // pred_check_branch
        %846 = sbr.rel (%p844) target = $region76
      $region75: #{tpu_custom_call.1} parent=5 // pred_region
        %s847 = ssub.s32 %s21, 2
        // Predicated region
        $region77: #{tpu_custom_call.1} parent=75 // pred_check
          %p848 = pneg %p307
        $region78: #{tpu_custom_call.1} parent=75 // pred_check_branch
          %850 = sbr.rel (%p848) target = $region80
        $region79: #{tpu_custom_call.1} parent=75 // pred_region
          %s851 = sand.u32 %s292, 1
          %s852 = scalar_lea.sflag [#allocation3], %s851
          %s853 = sand.u32 %s292, 1
          %s854 = smul.addr %s853, 8
          %s855 = scalar_lea.vmem [#allocation2], %s854
          %856 = dma.done %s852, 128
        $region80: #{tpu_custom_call.1} parent=75 // pred_fallthru
          _
      $region76: #{tpu_custom_call.1} parent=5 // pred_fallthru
        _
    $region6: #{tpu_custom_call.1} parent=1 // loop_footer
      %s25 = sadd.s32 1, %s21
    $region7: #{tpu_custom_call.1} parent=1 // loop_footer_branch
      %20 = sbr.rel target = $region3
    $region8: #{tpu_custom_call.1} parent=1 // loop_exit
      _
    %857 = vsyncpa [#allocation3], 1
    %s858 = scalar_lea.sflag [#allocation3], 1
    %859 = vsyncpa %s858, 1

</llo_original>
